<compile_context>
chip_gen: v7x
topology: tpu7x:2x2x1
jax: 0.10.0
libtpu: 0.0.40
codegen_flags: <defaults>
</compile_context>

<pallas_src>
import functools

import jax
import jax.numpy as jnp
from jax.experimental import pallas as pl
from jax.experimental.pallas import tpu as pltpu


_LANE = 128
_SUBLANE = 8
_VMEM_LIMIT_BYTES = 48 * 1024 * 1024   # <= v7x 64 MiB/TC physical, with headroom
_VMEM_BUDGET_BYTES = 32 * 1024 * 1024  # what block/temp/scratch sizing plans against
_MAX_TILE_B = 1024                     # keeps lane-padded labels + row scratch small
_N_ROW_SCRATCH = 7                     # m, s, s_t, sum(y*x), sum(y), sum(y*log y), x_pick
_N_F32_TEMPS = 6                       # live (tile_b, block_c) f32 temporaries assumed


def _round_up(x, m):
    return ((x + m - 1) // m) * m


def _choose_tiling(B, C, in_itemsize, max_block_c=None):
    """Pick (tile_b, block_c) against a real VMEM plan."""
    # Per-element bytes: 2 inputs x 2 pipeline buffers + live f32 temporaries.
    per_elem = 4 * in_itemsize + 4 * _N_F32_TEMPS
    # Per-row bytes: double-buffered int32 labels + 7 f32 row accumulators,
    # all lane-padded to 128 lanes.
    per_row = (2 + _N_ROW_SCRATCH) * _LANE * 4

    c_pad = _round_up(C, _LANE)
    block_c = c_pad
    if max_block_c is not None:
        block_c = min(block_c, max(_LANE, (max_block_c // _LANE) * _LANE))
    # Make sure at least 8 rows fit -> split C when it is vocab-scale.
    max_cols = (_VMEM_BUDGET_BYTES // _SUBLANE - per_row) // per_elem
    max_cols = max(_LANE, (max_cols // _LANE) * _LANE)
    block_c = min(block_c, max_cols)

    tile_b = _VMEM_BUDGET_BYTES // (block_c * per_elem + per_row)
    tile_b = min(_MAX_TILE_B, max(_SUBLANE, (tile_b // _SUBLANE) * _SUBLANE))

    # v7x megacore: guarantee >= 2 batch blocks whenever the batch allows it.
    b_pad = _round_up(B, _SUBLANE)
    if b_pad >= 2 * _SUBLANE:
        tile_b = min(tile_b, max(_SUBLANE, ((b_pad // 2) // _SUBLANE) * _SUBLANE))
    tile_b = min(tile_b, b_pad)
    return tile_b, block_c


def _teach_loss_kernel(x_ref, y_ref, t_ref, o_ref,
                       m_sc, s_sc, st_sc, yx_sc, ysum_sc, ylogy_sc, xpick_sc,
                       *, temperature, alpha, B, C, block_c):
    j = pl.program_id(1)
    nc = pl.num_programs(1)
    inv_t = 1.0 / temperature

    @pl.when(j == 0)
    def _():
        m_sc[...] = jnp.full_like(m_sc, -jnp.inf)
        s_sc[...] = jnp.zeros_like(s_sc)
        st_sc[...] = jnp.zeros_like(st_sc)
        yx_sc[...] = jnp.zeros_like(yx_sc)
        ysum_sc[...] = jnp.zeros_like(ysum_sc)
        ylogy_sc[...] = jnp.zeros_like(ylogy_sc)
        xpick_sc[...] = jnp.zeros_like(xpick_sc)

    x = x_ref[...].astype(jnp.float32)          # (tile_b, block_c)
    y = y_ref[...].astype(jnp.float32)          # (tile_b, block_c)
    labels = t_ref[...]                         # (tile_b, 1) int32

    # ---- online (flash-style) LSE accumulators, shared row max for x and x/T.
    m_old = m_sc[...]
    m_new = jnp.maximum(m_old, jnp.max(x, axis=1, keepdims=True))
    z = x - m_new
    a = jnp.exp(m_old - m_new)
    a_t = jnp.exp((m_old - m_new) * inv_t)
    s_sc[...] = a * s_sc[...] + jnp.sum(jnp.exp(z), axis=1, keepdims=True)
    st_sc[...] = a_t * st_sc[...] + jnp.sum(jnp.exp(z * inv_t), axis=1, keepdims=True)
    m_sc[...] = m_new

    # ---- streaming per-row partial sums (single pass, keepdims row reduces).
    yx_sc[...] += jnp.sum(y * x, axis=1, keepdims=True)
    ysum_sc[...] += jnp.sum(y, axis=1, keepdims=True)
    safe_y = jnp.where(y > 0.0, y, 1.0)
    ylogy_sc[...] += jnp.sum(jnp.where(y > 0.0, y * jnp.log(safe_y), 0.0),
                             axis=1, keepdims=True)
    col_ids = jax.lax.broadcasted_iota(jnp.int32, x.shape, 1) + j * block_c
    xpick_sc[...] += jnp.sum(jnp.where(col_ids == labels, x, 0.0),
                             axis=1, keepdims=True)

    # ---- finalize on the last class block.
    @pl.when(j == nc - 1)
    def _():
        m = m_sc[...]
        lse = m + jnp.log(s_sc[...])                     # logsumexp(x) per row
        lse_t = m * inv_t + jnp.log(st_sc[...])          # logsumexp(x / T) per row
        # KL per row: sum(y*log y) - sum(y * log_softmax(x/T))
        kl_rows = ylogy_sc[...] - (inv_t * yx_sc[...] - lse_t * ysum_sc[...])
        # CE per row: -(x[target] - lse); padded rows carry label -1 -> masked out.
        picked_rows = jnp.where(labels >= 0, xpick_sc[...] - lse, 0.0)
        t2 = temperature * temperature
        contribution = (alpha * t2 / (B * C)) * jnp.sum(kl_rows) \
            - ((1.0 - alpha) / B) * jnp.sum(picked_rows)
        o_ref[...] = jnp.broadcast_to(contribution, o_ref.shape).astype(jnp.float32)


def teach_loss(student_logits, teacher_softmax, target, *, temperature, alpha,
               input_dtype=jnp.bfloat16, max_block_c=None):
    """Pallas TPU TeachLoss.  input_dtype=bfloat16 halves HBM traffic (all math
    stays f32 in-kernel); pass jnp.float32 for bit-tight f32 semantics."""
    assert 0.0 <= alpha <= 1.0
    B, C = student_logits.shape
    assert teacher_softmax.shape == (B, C)

    x = student_logits.astype(input_dtype)
    y = teacher_softmax.astype(input_dtype)
    in_itemsize = jnp.dtype(input_dtype).itemsize

    tile_b, block_c = _choose_tiling(B, C, in_itemsize, max_block_c)
    num_b = -(-B // tile_b)
    num_c = -(-C // block_c)
    padded_B = num_b * tile_b
    padded_C = num_c * block_c

    t2d = target.astype(jnp.int32).reshape(B, 1)

    if padded_C != C:
        pc = padded_C - C
        # Padded classes: logit -1e30 (drops out of both softmaxes), teacher 0.
        x = jnp.pad(x, ((0, 0), (0, pc)), constant_values=-1e30)
        y = jnp.pad(y, ((0, 0), (0, pc)))
    if padded_B != B:
        pb = padded_B - B
        # Padded rows: zero logits / zero teacher -> zero KL; label -1 -> no CE pick.
        x = jnp.pad(x, ((0, pb), (0, 0)))
        y = jnp.pad(y, ((0, pb), (0, 0)))
        t2d = jnp.pad(t2d, ((0, pb), (0, 0)), constant_values=-1)

    kernel = functools.partial(
        _teach_loss_kernel,
        temperature=float(temperature),
        alpha=float(alpha),
        B=B, C=C, block_c=block_c,
    )

    bytes_accessed = int(B * C * 2 * in_itemsize + B * 4 + num_b * 8 * 128 * 4)

    partials = pl.pallas_call(
        kernel,
        out_shape=jax.ShapeDtypeStruct((num_b, 8, 128), jnp.float32),
        grid_spec=pltpu.PrefetchScalarGridSpec(
            num_scalar_prefetch=0,
            grid=(num_b, num_c),
            in_specs=[
                pl.BlockSpec((tile_b, block_c), lambda i, j: (i, j)),   # student logits
                pl.BlockSpec((tile_b, block_c), lambda i, j: (i, j)),   # teacher softmax
                pl.BlockSpec((tile_b, 1), lambda i, j: (i, 0)),         # int32 targets
            ],
            out_specs=pl.BlockSpec((1, 8, 128), lambda i, j: (i, 0, 0)),
            scratch_shapes=[pltpu.VMEM((tile_b, 1), jnp.float32)] * _N_ROW_SCRATCH,
        ),
        compiler_params=pltpu.CompilerParams(
            dimension_semantics=("parallel", "arbitrary"),
            vmem_limit_bytes=_VMEM_LIMIT_BYTES,
        ),
        cost_estimate=pl.CostEstimate(
            flops=int(12 * B * C),
            transcendentals=int(3 * B * C),
            bytes_accessed=bytes_accessed,
        ),
    )(x, y, t2d)

    # Tiny final combine over batch blocks.
    return jnp.sum(partials[:, 0, 0])


def teach_loss_ref(student_logits, teacher_softmax, target, *, temperature, alpha):
    """Pure-JAX f32 reference matching the PyTorch forward."""
    B, C = student_logits.shape
    log_sm_t = jax.nn.log_softmax(student_logits / temperature, axis=1)
    y = teacher_softmax
    kl_elem = jnp.where(y > 0, y * (jnp.log(jnp.where(y > 0, y, 1.0)) - log_sm_t), 0.0)
    distill = temperature * temperature * jnp.sum(kl_elem) / (B * C)
    log_sm = jax.nn.log_softmax(student_logits, axis=1)
    ce = -jnp.mean(log_sm[jnp.arange(B), target])
    return alpha * distill + (1.0 - alpha) * ce


if __name__ == "__main__":
    temperature = 4.0
    alpha = 0.7
    key = jax.random.PRNGKey(0)
    keys = jax.random.split(key, 3)

    def make_case(k, B, C):
        k1, k2, k3 = jax.random.split(k, 3)
        logits = jax.random.normal(k1, (B, C), dtype=jnp.float32) * 2.0
        teacher = jax.nn.softmax(
            jax.random.normal(k2, (B, C), dtype=jnp.float32) * 2.0 / temperature, axis=1)
        tgt = jax.random.randint(k3, (B,), 0, C, dtype=jnp.int32)
        return logits, teacher, tgt

    # Case 1: small, evenly tiled, f32 input path -> tight check of kernel math.
    sl, ts, tg = make_case(keys[0], 8, 128)
    out = jax.block_until_ready(
        teach_loss(sl, ts, tg, temperature=temperature, alpha=alpha,
                   input_dtype=jnp.float32))
    ref = teach_loss_ref(sl, ts, tg, temperature=temperature, alpha=alpha)
    assert jnp.allclose(out, ref, rtol=1e-4, atol=1e-4), (out, ref)

    # Case 2: ragged batch + ragged C + forced class split (online-LSE path),
    # default bf16 HBM payload -> small quantization drift vs f32 reference.
    sl, ts, tg = make_case(keys[1], 20, 200)
    out = jax.block_until_ready(
        teach_loss(sl, ts, tg, temperature=temperature, alpha=alpha,
                   max_block_c=128))
    ref = teach_loss_ref(sl, ts, tg, temperature=temperature, alpha=alpha)
    assert jnp.allclose(out, ref, rtol=3e-2, atol=3e-2), (out, ref)

    # Case 3: >= 2 batch blocks (megacore path), single class block, bf16 inputs.
    sl, ts, tg = make_case(keys[2], 16, 384)
    out = jax.block_until_ready(
        teach_loss(sl, ts, tg, temperature=temperature, alpha=alpha))
    ref = teach_loss_ref(sl, ts, tg, temperature=temperature, alpha=alpha)
    assert jnp.allclose(out, ref, rtol=3e-2, atol=3e-2), (out, ref)

    print("KERNEL_OK")
</pallas_src>

<mosaic_0001>
module attributes {stable_mosaic.version = 11 : i64} {
  func.func @_teach_loss_kernel(%arg0: i32, %arg1: i32, %arg2: memref<8x128xf32, #tpu.memory_space<vmem>>, %arg3: memref<8x128xf32, #tpu.memory_space<vmem>>, %arg4: memref<8x1xi32, #tpu.memory_space<vmem>>, %arg5: memref<1x8x128xf32, #tpu.memory_space<vmem>>, %arg6: memref<8x1xf32, #tpu.memory_space<vmem>>, %arg7: memref<8x1xf32, #tpu.memory_space<vmem>>, %arg8: memref<8x1xf32, #tpu.memory_space<vmem>>, %arg9: memref<8x1xf32, #tpu.memory_space<vmem>>, %arg10: memref<8x1xf32, #tpu.memory_space<vmem>>, %arg11: memref<8x1xf32, #tpu.memory_space<vmem>>, %arg12: memref<8x1xf32, #tpu.memory_space<vmem>>) attributes {dimension_semantics = [#tpu.dimension_semantics<parallel>, #tpu.dimension_semantics<arbitrary>], iteration_bounds = array<i64: 1, 1>, scalar_prefetch = 0 : i64, scratch_operands = 7 : i64, tpu.core_type = #tpu.core_type<tc>, window_params = [{transform_indices = @transform_0, window_bounds = array<i64: 8, 128>}, {transform_indices = @transform_1, window_bounds = array<i64: 8, 128>}, {transform_indices = @transform_2, window_bounds = array<i64: 8, 1>}, {transform_indices = @transform_3, window_bounds = array<i64: 1, 8, 128>}]} {
    %c0_i32 = arith.constant 0 : i32
    %0 = arith.cmpi eq, %arg1, %c0_i32 : i32
    %1 = arith.extui %0 : i1 to i32
    %c0_i32_0 = arith.constant 0 : i32
    %2 = arith.cmpi ne, %1, %c0_i32_0 : i32
    scf.if %2 {
      %cst_49 = arith.constant 0xFF800000 : f32
      %77 = vector.broadcast %cst_49 : f32 to vector<8x1xf32>
      %c0_50 = arith.constant 0 : index
      %c0_51 = arith.constant 0 : index
      %78 = vector.load %arg6[%c0_50, %c0_51] : memref<8x1xf32, #tpu.memory_space<vmem>>, vector<8x1xf32>
      tpu.vector_store %arg6[%c0_50, %c0_51], %77 {strides = array<i32>} : memref<8x1xf32, #tpu.memory_space<vmem>>, vector<8x1xf32>,
      %cst_52 = arith.constant 0.000000e+00 : f32
      %79 = vector.broadcast %cst_52 : f32 to vector<8x1xf32>
      %c0_53 = arith.constant 0 : index
      %c0_54 = arith.constant 0 : index
      %80 = vector.load %arg7[%c0_53, %c0_54] : memref<8x1xf32, #tpu.memory_space<vmem>>, vector<8x1xf32>
      tpu.vector_store %arg7[%c0_53, %c0_54], %79 {strides = array<i32>} : memref<8x1xf32, #tpu.memory_space<vmem>>, vector<8x1xf32>,
      %cst_55 = arith.constant 0.000000e+00 : f32
      %81 = vector.broadcast %cst_55 : f32 to vector<8x1xf32>
      %c0_56 = arith.constant 0 : index
      %c0_57 = arith.constant 0 : index
      %82 = vector.load %arg8[%c0_56, %c0_57] : memref<8x1xf32, #tpu.memory_space<vmem>>, vector<8x1xf32>
      tpu.vector_store %arg8[%c0_56, %c0_57], %81 {strides = array<i32>} : memref<8x1xf32, #tpu.memory_space<vmem>>, vector<8x1xf32>,
      %cst_58 = arith.constant 0.000000e+00 : f32
      %83 = vector.broadcast %cst_58 : f32 to vector<8x1xf32>
      %c0_59 = arith.constant 0 : index
      %c0_60 = arith.constant 0 : index
      %84 = vector.load %arg9[%c0_59, %c0_60] : memref<8x1xf32, #tpu.memory_space<vmem>>, vector<8x1xf32>
      tpu.vector_store %arg9[%c0_59, %c0_60], %83 {strides = array<i32>} : memref<8x1xf32, #tpu.memory_space<vmem>>, vector<8x1xf32>,
      %cst_61 = arith.constant 0.000000e+00 : f32
      %85 = vector.broadcast %cst_61 : f32 to vector<8x1xf32>
      %c0_62 = arith.constant 0 : index
      %c0_63 = arith.constant 0 : index
      %86 = vector.load %arg10[%c0_62, %c0_63] : memref<8x1xf32, #tpu.memory_space<vmem>>, vector<8x1xf32>
      tpu.vector_store %arg10[%c0_62, %c0_63], %85 {strides = array<i32>} : memref<8x1xf32, #tpu.memory_space<vmem>>, vector<8x1xf32>,
      %cst_64 = arith.constant 0.000000e+00 : f32
      %87 = vector.broadcast %cst_64 : f32 to vector<8x1xf32>
      %c0_65 = arith.constant 0 : index
      %c0_66 = arith.constant 0 : index
      %88 = vector.load %arg11[%c0_65, %c0_66] : memref<8x1xf32, #tpu.memory_space<vmem>>, vector<8x1xf32>
      tpu.vector_store %arg11[%c0_65, %c0_66], %87 {strides = array<i32>} : memref<8x1xf32, #tpu.memory_space<vmem>>, vector<8x1xf32>,
      %cst_67 = arith.constant 0.000000e+00 : f32
      %89 = vector.broadcast %cst_67 : f32 to vector<8x1xf32>
      %c0_68 = arith.constant 0 : index
      %c0_69 = arith.constant 0 : index
      %90 = vector.load %arg12[%c0_68, %c0_69] : memref<8x1xf32, #tpu.memory_space<vmem>>, vector<8x1xf32>
      tpu.vector_store %arg12[%c0_68, %c0_69], %89 {strides = array<i32>} : memref<8x1xf32, #tpu.memory_space<vmem>>, vector<8x1xf32>,
    } else {
    }
    %c0 = arith.constant 0 : index
    %c0_1 = arith.constant 0 : index
    %3 = vector.load %arg2[%c0, %c0_1] : memref<8x128xf32, #tpu.memory_space<vmem>>, vector<8x128xf32>
    %c0_2 = arith.constant 0 : index
    %c0_3 = arith.constant 0 : index
    %4 = vector.load %arg3[%c0_2, %c0_3] : memref<8x128xf32, #tpu.memory_space<vmem>>, vector<8x128xf32>
    %c0_4 = arith.constant 0 : index
    %c0_5 = arith.constant 0 : index
    %5 = vector.load %arg4[%c0_4, %c0_5] : memref<8x1xi32, #tpu.memory_space<vmem>>, vector<8x1xi32>
    %c0_6 = arith.constant 0 : index
    %c0_7 = arith.constant 0 : index
    %6 = vector.load %arg6[%c0_6, %c0_7] : memref<8x1xf32, #tpu.memory_space<vmem>>, vector<8x1xf32>
    %cst = arith.constant dense<0xFF800000> : vector<8xf32>
    %7 = vector.multi_reduction <maximumf>, %3, %cst [1] : vector<8x128xf32> to vector<8xf32>
    %8 = vector.shape_cast %7 : vector<8xf32> to vector<8x1xf32>
    %9 = arith.maximumf %6, %8 : vector<8x1xf32>
    %10 = vector.broadcast %9 : vector<8x1xf32> to vector<8x128xf32>
    %11 = arith.subf %3, %10 : vector<8x128xf32>
    %12 = arith.subf %6, %9 : vector<8x1xf32>
    %13 = math.exp %12 : vector<8x1xf32>
    %14 = arith.subf %6, %9 : vector<8x1xf32>
    %cst_8 = arith.constant 2.500000e-01 : f32
    %15 = vector.broadcast %cst_8 : f32 to vector<8x1xf32>
    %16 = arith.mulf %14, %15 : vector<8x1xf32>
    %17 = math.exp %16 : vector<8x1xf32>
    %c0_9 = arith.constant 0 : index
    %c0_10 = arith.constant 0 : index
    %18 = vector.load %arg7[%c0_9, %c0_10] : memref<8x1xf32, #tpu.memory_space<vmem>>, vector<8x1xf32>
    %19 = arith.mulf %13, %18 : vector<8x1xf32>
    %20 = math.exp %11 : vector<8x128xf32>
    %cst_11 = arith.constant dense<0.000000e+00> : vector<8xf32>
    %21 = vector.multi_reduction <add>, %20, %cst_11 [1] : vector<8x128xf32> to vector<8xf32>
    %22 = vector.shape_cast %21 : vector<8xf32> to vector<8x1xf32>
    %23 = arith.addf %19, %22 : vector<8x1xf32>
    %c0_12 = arith.constant 0 : index
    %c0_13 = arith.constant 0 : index
    %24 = vector.load %arg7[%c0_12, %c0_13] : memref<8x1xf32, #tpu.memory_space<vmem>>, vector<8x1xf32>
    tpu.vector_store %arg7[%c0_12, %c0_13], %23 {strides = array<i32>} : memref<8x1xf32, #tpu.memory_space<vmem>>, vector<8x1xf32>,
    %c0_14 = arith.constant 0 : index
    %c0_15 = arith.constant 0 : index
    %25 = vector.load %arg8[%c0_14, %c0_15] : memref<8x1xf32, #tpu.memory_space<vmem>>, vector<8x1xf32>
    %26 = arith.mulf %17, %25 : vector<8x1xf32>
    %cst_16 = arith.constant 2.500000e-01 : f32
    %27 = vector.broadcast %cst_16 : f32 to vector<8x128xf32>
    %28 = arith.mulf %11, %27 : vector<8x128xf32>
    %29 = math.exp %28 : vector<8x128xf32>
    %cst_17 = arith.constant dense<0.000000e+00> : vector<8xf32>
    %30 = vector.multi_reduction <add>, %29, %cst_17 [1] : vector<8x128xf32> to vector<8xf32>
    %31 = vector.shape_cast %30 : vector<8xf32> to vector<8x1xf32>
    %32 = arith.addf %26, %31 : vector<8x1xf32>
    %c0_18 = arith.constant 0 : index
    %c0_19 = arith.constant 0 : index
    %33 = vector.load %arg8[%c0_18, %c0_19] : memref<8x1xf32, #tpu.memory_space<vmem>>, vector<8x1xf32>
    tpu.vector_store %arg8[%c0_18, %c0_19], %32 {strides = array<i32>} : memref<8x1xf32, #tpu.memory_space<vmem>>, vector<8x1xf32>,
    %c0_20 = arith.constant 0 : index
    %c0_21 = arith.constant 0 : index
    %34 = vector.load %arg6[%c0_20, %c0_21] : memref<8x1xf32, #tpu.memory_space<vmem>>, vector<8x1xf32>
    tpu.vector_store %arg6[%c0_20, %c0_21], %9 {strides = array<i32>} : memref<8x1xf32, #tpu.memory_space<vmem>>, vector<8x1xf32>,
    %c0_22 = arith.constant 0 : index
    %c0_23 = arith.constant 0 : index
    %35 = vector.load %arg9[%c0_22, %c0_23] : memref<8x1xf32, #tpu.memory_space<vmem>>, vector<8x1xf32>
    %36 = arith.mulf %4, %3 : vector<8x128xf32>
    %cst_24 = arith.constant dense<0.000000e+00> : vector<8xf32>
    %37 = vector.multi_reduction <add>, %36, %cst_24 [1] : vector<8x128xf32> to vector<8xf32>
    %38 = vector.shape_cast %37 : vector<8xf32> to vector<8x1xf32>
    %39 = arith.addf %35, %38 : vector<8x1xf32>
    %c0_25 = arith.constant 0 : index
    %c0_26 = arith.constant 0 : index
    %40 = vector.load %arg9[%c0_25, %c0_26] : memref<8x1xf32, #tpu.memory_space<vmem>>, vector<8x1xf32>
    tpu.vector_store %arg9[%c0_25, %c0_26], %39 {strides = array<i32>} : memref<8x1xf32, #tpu.memory_space<vmem>>, vector<8x1xf32>,
    %c0_27 = arith.constant 0 : index
    %c0_28 = arith.constant 0 : index
    %41 = vector.load %arg10[%c0_27, %c0_28] : memref<8x1xf32, #tpu.memory_space<vmem>>, vector<8x1xf32>
    %cst_29 = arith.constant dense<0.000000e+00> : vector<8xf32>
    %42 = vector.multi_reduction <add>, %4, %cst_29 [1] : vector<8x128xf32> to vector<8xf32>
    %43 = vector.shape_cast %42 : vector<8xf32> to vector<8x1xf32>
    %44 = arith.addf %41, %43 : vector<8x1xf32>
    %c0_30 = arith.constant 0 : index
    %c0_31 = arith.constant 0 : index
    %45 = vector.load %arg10[%c0_30, %c0_31] : memref<8x1xf32, #tpu.memory_space<vmem>>, vector<8x1xf32>
    tpu.vector_store %arg10[%c0_30, %c0_31], %44 {strides = array<i32>} : memref<8x1xf32, #tpu.memory_space<vmem>>, vector<8x1xf32>,
    %cst_32 = arith.constant 0.000000e+00 : f32
    %46 = vector.broadcast %cst_32 : f32 to vector<8x128xf32>
    %47 = arith.cmpf ogt, %4, %46 : vector<8x128xf32>
    %cst_33 = arith.constant 1.000000e+00 : f32
    %48 = vector.broadcast %cst_33 : f32 to vector<8x128xf32>
    %49 = arith.select %47, %4, %48 : vector<8x128xi1>, vector<8x128xf32>
    %c0_34 = arith.constant 0 : index
    %c0_35 = arith.constant 0 : index
    %50 = vector.load %arg11[%c0_34, %c0_35] : memref<8x1xf32, #tpu.memory_space<vmem>>, vector<8x1xf32>
    %cst_36 = arith.constant 0.000000e+00 : f32
    %51 = vector.broadcast %cst_36 : f32 to vector<8x128xf32>
    %52 = arith.cmpf ogt, %4, %51 : vector<8x128xf32>
    %53 = math.log %49 : vector<8x128xf32>
    %54 = arith.mulf %4, %53 : vector<8x128xf32>
    %cst_37 = arith.constant 0.000000e+00 : f32
    %55 = vector.broadcast %cst_37 : f32 to vector<8x128xf32>
    %56 = arith.select %52, %54, %55 : vector<8x128xi1>, vector<8x128xf32>
    %cst_38 = arith.constant dense<0.000000e+00> : vector<8xf32>
    %57 = vector.multi_reduction <add>, %56, %cst_38 [1] : vector<8x128xf32> to vector<8xf32>
    %58 = vector.shape_cast %57 : vector<8xf32> to vector<8x1xf32>
    %59 = arith.addf %50, %58 : vector<8x1xf32>
    %c0_39 = arith.constant 0 : index
    %c0_40 = arith.constant 0 : index
    %60 = vector.load %arg11[%c0_39, %c0_40] : memref<8x1xf32, #tpu.memory_space<vmem>>, vector<8x1xf32>
    tpu.vector_store %arg11[%c0_39, %c0_40], %59 {strides = array<i32>} : memref<8x1xf32, #tpu.memory_space<vmem>>, vector<8x1xf32>,
    %61 = tpu.iota {dimensions = array<i32: 1>} : vector<8x128xi32>
    %c128_i32 = arith.constant 128 : i32
    %62 = arith.muli %arg1, %c128_i32 : i32
    %63 = vector.broadcast %62 : i32 to vector<8x128xi32>
    %64 = arith.addi %61, %63 : vector<8x128xi32>
    %c0_41 = arith.constant 0 : index
    %c0_42 = arith.constant 0 : index
    %65 = vector.load %arg12[%c0_41, %c0_42] : memref<8x1xf32, #tpu.memory_space<vmem>>, vector<8x1xf32>
    %66 = vector.broadcast %5 : vector<8x1xi32> to vector<8x128xi32>
    %67 = arith.cmpi eq, %64, %66 : vector<8x128xi32>
    %cst_43 = arith.constant 0.000000e+00 : f32
    %68 = vector.broadcast %cst_43 : f32 to vector<8x128xf32>
    %69 = arith.select %67, %3, %68 : vector<8x128xi1>, vector<8x128xf32>
    %cst_44 = arith.constant dense<0.000000e+00> : vector<8xf32>
    %70 = vector.multi_reduction <add>, %69, %cst_44 [1] : vector<8x128xf32> to vector<8xf32>
    %71 = vector.shape_cast %70 : vector<8xf32> to vector<8x1xf32>
    %72 = arith.addf %65, %71 : vector<8x1xf32>
    %c0_45 = arith.constant 0 : index
    %c0_46 = arith.constant 0 : index
    %73 = vector.load %arg12[%c0_45, %c0_46] : memref<8x1xf32, #tpu.memory_space<vmem>>, vector<8x1xf32>
    tpu.vector_store %arg12[%c0_45, %c0_46], %72 {strides = array<i32>} : memref<8x1xf32, #tpu.memory_space<vmem>>, vector<8x1xf32>,
    %c0_i32_47 = arith.constant 0 : i32
    %74 = arith.cmpi eq, %arg1, %c0_i32_47 : i32
    %75 = arith.extui %74 : i1 to i32
    %c0_i32_48 = arith.constant 0 : i32
    %76 = arith.cmpi ne, %75, %c0_i32_48 : i32
    scf.if %76 {
      %c0_49 = arith.constant 0 : index
      %c0_50 = arith.constant 0 : index
      %77 = vector.load %arg6[%c0_49, %c0_50] : memref<8x1xf32, #tpu.memory_space<vmem>>, vector<8x1xf32>
      %c0_51 = arith.constant 0 : index
      %c0_52 = arith.constant 0 : index
      %78 = vector.load %arg7[%c0_51, %c0_52] : memref<8x1xf32, #tpu.memory_space<vmem>>, vector<8x1xf32>
      %79 = math.log %78 : vector<8x1xf32>
      %80 = arith.addf %77, %79 : vector<8x1xf32>
      %cst_53 = arith.constant 2.500000e-01 : f32
      %81 = vector.broadcast %cst_53 : f32 to vector<8x1xf32>
      %82 = arith.mulf %77, %81 : vector<8x1xf32>
      %c0_54 = arith.constant 0 : index
      %c0_55 = arith.constant 0 : index
      %83 = vector.load %arg8[%c0_54, %c0_55] : memref<8x1xf32, #tpu.memory_space<vmem>>, vector<8x1xf32>
      %84 = math.log %83 : vector<8x1xf32>
      %85 = arith.addf %82, %84 : vector<8x1xf32>
      %c0_56 = arith.constant 0 : index
      %c0_57 = arith.constant 0 : index
      %86 = vector.load %arg11[%c0_56, %c0_57] : memref<8x1xf32, #tpu.memory_space<vmem>>, vector<8x1xf32>
      %c0_58 = arith.constant 0 : index
      %c0_59 = arith.constant 0 : index
      %87 = vector.load %arg9[%c0_58, %c0_59] : memref<8x1xf32, #tpu.memory_space<vmem>>, vector<8x1xf32>
      %cst_60 = arith.constant 2.500000e-01 : f32
      %88 = vector.broadcast %cst_60 : f32 to vector<8x1xf32>
      %89 = arith.mulf %88, %87 : vector<8x1xf32>
      %c0_61 = arith.constant 0 : index
      %c0_62 = arith.constant 0 : index
      %90 = vector.load %arg10[%c0_61, %c0_62] : memref<8x1xf32, #tpu.memory_space<vmem>>, vector<8x1xf32>
      %91 = arith.mulf %85, %90 : vector<8x1xf32>
      %92 = arith.subf %89, %91 : vector<8x1xf32>
      %93 = arith.subf %86, %92 : vector<8x1xf32>
      %c0_i32_63 = arith.constant 0 : i32
      %94 = vector.broadcast %c0_i32_63 : i32 to vector<8x1xi32>
      %95 = arith.cmpi sge, %5, %94 : vector<8x1xi32>
      %c0_64 = arith.constant 0 : index
      %c0_65 = arith.constant 0 : index
      %96 = vector.load %arg12[%c0_64, %c0_65] : memref<8x1xf32, #tpu.memory_space<vmem>>, vector<8x1xf32>
      %97 = arith.subf %96, %80 : vector<8x1xf32>
      %cst_66 = arith.constant 0.000000e+00 : f32
      %98 = vector.broadcast %cst_66 : f32 to vector<8x1xf32>
      %99 = arith.select %95, %97, %98 : vector<8x1xi1>, vector<8x1xf32>
      %100 = vector.shape_cast %93 : vector<8x1xf32> to vector<1x8x1xf32>
      %cst_67 = arith.constant dense<0.000000e+00> : vector<1xf32>
      %101 = vector.multi_reduction <add>, %100, %cst_67 [1, 2] : vector<1x8x1xf32> to vector<1xf32>
      %102 = vector.shape_cast %101 : vector<1xf32> to vector<1x1x1xf32>
      %103 = vector.extract %102[0, 0, 0] : f32 from vector<1x1x1xf32>
      %cst_68 = arith.constant 1.093750e-02 : f32
      %104 = arith.mulf %cst_68, %103 : f32
      %105 = vector.shape_cast %99 : vector<8x1xf32> to vector<1x8x1xf32>
      %cst_69 = arith.constant dense<0.000000e+00> : vector<1xf32>
      %106 = vector.multi_reduction <add>, %105, %cst_69 [1, 2] : vector<1x8x1xf32> to vector<1xf32>
      %107 = vector.shape_cast %106 : vector<1xf32> to vector<1x1x1xf32>
      %108 = vector.extract %107[0, 0, 0] : f32 from vector<1x1x1xf32>
      %cst_70 = arith.constant 3.750000e-02 : f32
      %109 = arith.mulf %cst_70, %108 : f32
      %110 = arith.subf %104, %109 : f32
      %111 = vector.broadcast %110 : f32 to vector<1x8x128xf32>
      %c0_71 = arith.constant 0 : index
      %c0_72 = arith.constant 0 : index
      %c0_73 = arith.constant 0 : index
      %112 = vector.load %arg5[%c0_71, %c0_72, %c0_73] : memref<1x8x128xf32, #tpu.memory_space<vmem>>, vector<1x8x128xf32>
      tpu.vector_store %arg5[%c0_71, %c0_72, %c0_73], %111 {strides = array<i32>} : memref<1x8x128xf32, #tpu.memory_space<vmem>>, vector<1x8x128xf32>,
    } else {
    }
    return
  }
  func.func @transform_0(%arg0: i32, %arg1: i32) -> (i32, i32) {
    %c0_i32 = arith.constant 0 : i32
    return %arg0, %arg1 : i32, i32
  }
  func.func @transform_1(%arg0: i32, %arg1: i32) -> (i32, i32) {
    %c0_i32 = arith.constant 0 : i32
    return %arg0, %arg1 : i32, i32
  }
  func.func @transform_2(%arg0: i32, %arg1: i32) -> (i32, i32) {
    %c0_i32 = arith.constant 0 : i32
    %c0_i32_0 = arith.constant 0 : i32
    return %arg0, %c0_i32 : i32, i32
  }
  func.func @transform_3(%arg0: i32, %arg1: i32) -> (i32, i32, i32) {
    %c0_i32 = arith.constant 0 : i32
    %c0_i32_0 = arith.constant 0 : i32
    %c0_i32_1 = arith.constant 0 : i32
    return %arg0, %c0_i32, %c0_i32_0 : i32, i32, i32
  }
}

</mosaic_0001>

<llo_original>
// kernel: tpu_custom_call.1
$region0: #{tpu_custom_call.1}
  #allocation0 [shape = 'u32[]', space=smem, size = 0x4, offset = 0x4, fixed_abs, tag = 'smem constant byte address 0x4 - core index']
  #allocation1 [shape = 'u32[144,128]{1,0:T(1,128)}', space=vmem, size = 0x12000, scoped, tag = 'internal scratch']
  #allocation2 [shape = 'f32[8,1]{1,0:T(8,128)}', space=vmem, size = 0x1000, scoped, tag = 'scratch operand']
  #allocation3 [shape = 'f32[8,1]{1,0:T(8,128)}', space=vmem, size = 0x1000, scoped, tag = 'scratch operand']
  #allocation4 [shape = 'f32[8,1]{1,0:T(8,128)}', space=vmem, size = 0x1000, scoped, tag = 'scratch operand']
  #allocation5 [shape = 'f32[8,1]{1,0:T(8,128)}', space=vmem, size = 0x1000, scoped, tag = 'scratch operand']
  #allocation6 [shape = 'f32[8,1]{1,0:T(8,128)}', space=vmem, size = 0x1000, scoped, tag = 'scratch operand']
  #allocation7 [shape = 'f32[8,1]{1,0:T(8,128)}', space=vmem, size = 0x1000, scoped, tag = 'scratch operand']
  #allocation8 [shape = 'f32[8,1]{1,0:T(8,128)}', space=vmem, size = 0x1000, scoped, tag = 'scratch operand']
  %s0 = inlined_call_operand.vmem [shape: f32[8,128], index: 0, kind: input, shape index: {}]
  %s1 = inlined_call_operand.hbm [shape: f32[8,128], index: 1, kind: input, shape index: {}]
  %s2 = inlined_call_operand.vmem [shape: s32[8,1], index: 2, kind: input, shape index: {}]
  %s3 = inlined_call_operand.hbm [shape: f32[1,8,128], index: 3, kind: output, shape index: {}]
  %s4 = sld [smem:[#allocation0]]
  $region34: #{tpu_custom_call.1} parent=0
    _
  %s6 = ssub.s32 1, %s4
  %s7 = scalar_select 0, %s6, %s4
  $region1: #{tpu_custom_call.1} parent=0
    #allocation9 [shape = 'u8[4096]{0}', space=vmem, size = 0x1000, scoped, tag = 'input window, operand 1, single buffered']
    #allocation10 [shape = 's32[1]{0}', space=sflag, size = 0x4, scoped, tag = 'scoped memory for tpu_custom_call.1']
    #allocation11 [shape = 's32[1]{0}', space=sflag, size = 0x4, scoped, tag = 'scoped memory for tpu_custom_call.1']
    #allocation12 [shape = 'u8[4096]{0}', space=vmem, size = 0x1000, scoped, tag = 'output window, operand 0, single buffered']
    %8 = vsyncpa [#allocation10], 0
    %9 = vsyncpa [#allocation11], 0
    // Predicated region
    $region2: #{tpu_custom_call.1} parent=1 // pred_check
      _
    $region3: #{tpu_custom_call.1} parent=1 // pred_check_branch
      %11 = sbr.rel (0) target = $region5
    $region4: #{tpu_custom_call.1} parent=1 // pred_region
      _
    $region5: #{tpu_custom_call.1} parent=1 // pred_fallthru
      _
    // Predicated region
    $region6: #{tpu_custom_call.1} parent=1 // pred_check
      _
    $region7: #{tpu_custom_call.1} parent=1 // pred_check_branch
      %13 = sbr.rel (0) target = $region9
    $region8: #{tpu_custom_call.1} parent=1 // pred_region
      %s15 = ssub.s32 128, 128
      %16 = vsyncadd [#allocation10], %s15
      %s18 = sshll.u32 [#allocation9], 4
      %s19 = int_to_ptr.vmem [resolvable:$true] %s18
      %21 = dma.hbm_to_vmem [thread:$0]  %s1, 128, %s19, [#allocation10]
    $region9: #{tpu_custom_call.1} parent=1 // pred_fallthru
      _
    // Predicated region
    $region10: #{tpu_custom_call.1} parent=1 // pred_check
      _
    $region11: #{tpu_custom_call.1} parent=1 // pred_check_branch
      %23 = sbr.rel (0) target = $region13
    $region12: #{tpu_custom_call.1} parent=1 // pred_region
      _
    $region13: #{tpu_custom_call.1} parent=1 // pred_fallthru
      _
    // Predicated region
    $region14: #{tpu_custom_call.1} parent=1 // pred_check
      _
    $region15: #{tpu_custom_call.1} parent=1 // pred_check_branch
      %25 = sbr.rel (0) target = $region17
    $region16: #{tpu_custom_call.1} parent=1 // pred_region
      %26 = dma.done [#allocation10], 128
    $region17: #{tpu_custom_call.1} parent=1 // pred_fallthru
      _
    %p27 = scmp.eq.s32.totalorder 0, 0
    // Predicated region
    $region18: #{tpu_custom_call.1} parent=1 // pred_check
      %p28 = pneg %p27
    $region19: #{tpu_custom_call.1} parent=1 // pred_check_branch
      %30 = sbr.rel (%p28) target = $region21
    $region20: #{tpu_custom_call.1} parent=1 // pred_region
      %vm31 = vcmask 7168
      %32 = vst.msk [vmem:[#allocation2] sm:$0xff] %vm31, -inf
      %33 = vst.msk [vmem:[#allocation3] sm:$0xff] %vm31, 0.0
      %34 = vst.msk [vmem:[#allocation4] sm:$0xff] %vm31, 0.0
      %35 = vst.msk [vmem:[#allocation5] sm:$0xff] %vm31, 0.0
      %36 = vst.msk [vmem:[#allocation6] sm:$0xff] %vm31, 0.0
      %37 = vst.msk [vmem:[#allocation7] sm:$0xff] %vm31, 0.0
      %38 = vst.msk [vmem:[#allocation8] sm:$0xff] %vm31, 0.0
    $region21: #{tpu_custom_call.1} parent=1 // pred_fallthru
      _
    %v39 = vld [vmem:[%s0] sm:$0xff]
    %v40 = vld [vmem:[#allocation9] sm:$0xff]
    %v41 = vld [vmem:[%s2] sm:$0xff]
    %v42 = vld [vmem:[#allocation2] sm:$0xff]
    %43 = vmax.xlane.f32.xlu0 %v39
    %v44 = vpop.xlane.xlu0 %43
    %v45 = vmax.f32 %v42, %v44
    %47 = vset.pattern.permute.xlu0 0
    %48 = vperm.xlu0 %47, %v45
    %v49 = vpop.permute.xlu0 %48
    %v51 = vsub.f32 %v39, %v49
    %v52 = vsub.f32 %v42, %v45
    %v53 = vmul.f32 %v52, 1.442695
    %v54 = vpow.pop %v53
    %v55 = vmul.f32 %v52, 0.25
    %v56 = vmul.f32 %v55, 1.442695
    %v57 = vpow.pop %v56
    %v58 = vld [vmem:[#allocation3] sm:$0xff]
    %v59 = vmul.f32 %v54, %v58
    %v60 = vmul.f32 %v51, 1.442695
    %v61 = vpow.pop %v60
    %62 = vadd.xlane.f32.xlu0 %v61
    %v63 = vpop.xlane.xlu0 %62
    %v64 = vadd.f32 %v59, %v63
    %vm65 = vcmask 7168
    %66 = vst.msk [vmem:[#allocation3] sm:$0xff] %vm65, %v64
    %v67 = vld [vmem:[#allocation4] sm:$0xff]
    %v68 = vmul.f32 %v57, %v67
    %v69 = vmul.f32 %v51, 0.25
    %v70 = vmul.f32 %v69, 1.442695
    %v71 = vpow.pop %v70
    %72 = vadd.xlane.f32.xlu0 %v71
    %v73 = vpop.xlane.xlu0 %72
    %v74 = vadd.f32 %v68, %v73
    %75 = vst.msk [vmem:[#allocation4] sm:$0xff] %vm65, %v74
    %76 = vst.msk [vmem:[#allocation2] sm:$0xff] %vm65, %v45
    %v77 = vld [vmem:[#allocation5] sm:$0xff]
    %v78 = vmul.f32 %v40, %v39
    %79 = vadd.xlane.f32.xlu0 %v78
    %v80 = vpop.xlane.xlu0 %79
    %v81 = vadd.f32 %v77, %v80
    %82 = vst.msk [vmem:[#allocation5] sm:$0xff] %vm65, %v81
    %v83 = vld [vmem:[#allocation6] sm:$0xff]
    %84 = vadd.xlane.f32.xlu0 %v40
    %v85 = vpop.xlane.xlu0 %84
    %v86 = vadd.f32 %v83, %v85
    %87 = vst.msk [vmem:[#allocation6] sm:$0xff] %vm65, %v86
    %vm88 = vcmp.gt.f32.partialorder %v40, 0.0
    %v89 = vsel %vm88, %v40, 1.0
    %v90 = vld [vmem:[#allocation7] sm:$0xff]
    %v91 = vlog2.pop %v89
    %v92 = vmul.f32 %v91, 0.6931472
    %v93 = vmul.f32 %v40, %v92
    %v94 = vsel %vm88, %v93, 0.0
    %95 = vadd.xlane.f32.xlu0 %v94
    %v96 = vpop.xlane.xlu0 %95
    %v97 = vadd.f32 %v90, %v96
    %98 = vst.msk [vmem:[#allocation7] sm:$0xff] %vm65, %v97
    %v99 = vlaneseq
    %v100 = vand.u32 %v99, 127
    %s101 = smul.u32 0, 128
    %v102 = vstv %s101
    %v103 = vadd.s32 %v100, %v102
    %v104 = vld [vmem:[#allocation8] sm:$0xff]
    %105 = vset.pattern.permute.xlu0 0
    %106 = vperm.xlu0 %105, %v41
    %v107 = vpop.permute.xlu0 %106
    %vm108 = vcmp.eq.s32.totalorder %v103, %v107
    %v109 = vsel %vm108, %v39, 0.0
    %110 = vadd.xlane.f32.xlu0 %v109
    %v111 = vpop.xlane.xlu0 %110
    %v112 = vadd.f32 %v104, %v111
    %113 = vst.msk [vmem:[#allocation8] sm:$0xff] %vm65, %v112
    // Predicated region
    $region22: #{tpu_custom_call.1} parent=1 // pred_check
      %p114 = pneg %p27
    $region23: #{tpu_custom_call.1} parent=1 // pred_check_branch
      %116 = sbr.rel (%p114) target = $region25
    $region24: #{tpu_custom_call.1} parent=1 // pred_region
      %v117 = vld [vmem:[#allocation2] sm:$0xff]
      %v118 = vld [vmem:[#allocation3] sm:$0xff]
      %v119 = vlog2.pop %v118
      %v120 = vmul.f32 %v119, 0.6931472
      %v121 = vadd.f32 %v117, %v120
      %v122 = vmul.f32 %v117, 0.25
      %v123 = vld [vmem:[#allocation4] sm:$0xff]
      %v124 = vlog2.pop %v123
      %v125 = vmul.f32 %v124, 0.6931472
      %v126 = vadd.f32 %v122, %v125
      %v127 = vld [vmem:[#allocation7] sm:$0xff]
      %v128 = vld [vmem:[#allocation5] sm:$0xff]
      %v129 = vmul.f32 %v128, 0.25
      %v130 = vld [vmem:[#allocation6] sm:$0xff]
      %v131 = vmul.f32 %v126, %v130
      %v132 = vsub.f32 %v129, %v131
      %v133 = vsub.f32 %v127, %v132
      %vm134 = vcmp.ge.s32.totalorder %v41, 0
      %v135 = vld [vmem:[#allocation8] sm:$0xff]
      %v136 = vsub.f32 %v135, %v121
      %v137 = vsel %vm134, %v136, 0.0
      %v138 = vsel %vm65, %v133, 0.0
      %139 = vadd.xlane.f32.xlu0 %v138
      %v140 = vpop.xlane.xlu0 %139
      %v141 = vrot.slane %v140, 4
      %v142 = vadd.f32 %v140, %v141
      %v143 = vrot.slane %v142, 2
      %v144 = vadd.f32 %v142, %v143
      %v145 = vrot.slane %v144, 1
      %v146 = vadd.f32 %v144, %v145
      %s147 = vtos %v146
      %s148 = smul.f32 %s147, 0.0109375
      %v149 = vsel %vm65, %v137, 0.0
      %150 = vadd.xlane.f32.xlu0 %v149
      %v151 = vpop.xlane.xlu0 %150
      %v152 = vrot.slane %v151, 4
      %v153 = vadd.f32 %v151, %v152
      %v154 = vrot.slane %v153, 2
      %v155 = vadd.f32 %v153, %v154
      %v156 = vrot.slane %v155, 1
      %v157 = vadd.f32 %v155, %v156
      %s158 = vtos %v157
      %s159 = smul.f32 %s158, 0.0375
      %s160 = ssub.f32 %s148, %s159
      %v161 = vstv %s160
      %162 = vst [vmem:[#allocation12] sm:$0xff] %v161
    $region25: #{tpu_custom_call.1} parent=1 // pred_fallthru
      _
    // Predicated region
    $region26: #{tpu_custom_call.1} parent=1 // pred_check
      _
    $region27: #{tpu_custom_call.1} parent=1 // pred_check_branch
      %164 = sbr.rel (0) target = $region29
    $region28: #{tpu_custom_call.1} parent=1 // pred_region
      %s166 = ssub.s32 128, 128
      %167 = vsyncadd [#allocation11], %s166
      %s169 = sshll.u32 [#allocation12], 4
      %s170 = int_to_ptr.vmem [resolvable:$true] %s169
      %172 = dma.vmem_to_hbm [thread:$0]  %s170, 128, %s3, [#allocation11]
    $region29: #{tpu_custom_call.1} parent=1 // pred_fallthru
      _
    // Predicated region
    $region30: #{tpu_custom_call.1} parent=1 // pred_check
      _
    $region31: #{tpu_custom_call.1} parent=1 // pred_check_branch
      %174 = sbr.rel (0) target = $region33
    $region32: #{tpu_custom_call.1} parent=1 // pred_region
      %175 = dma.done [#allocation11], 128
    $region33: #{tpu_custom_call.1} parent=1 // pred_fallthru
      _
    %176 = vsyncpa [#allocation10], 1
    %177 = vsyncpa [#allocation11], 1

</llo_original>
